<compile_context>
chip_gen: v6e
topology: v6e:2x2x1
jax: 0.10.0
libtpu: 0.0.40
codegen_flags: <defaults>
</compile_context>

<pallas_src>
import functools

import jax
import jax.numpy as jnp
from jax.experimental import pallas as pl
from jax.experimental.pallas import tpu as pltpu


def _round_up(x, m):
    return ((x + m - 1) // m) * m


def _detect_buffered_support():
    """One-time (import-time) check that BlockSpec(pipeline_mode=pl.Buffered(1))
    both constructs and lowers on this jax version / backend."""
    if not hasattr(pl, "Buffered"):
        return False
    try:
        spec = pl.BlockSpec((8, 128), lambda i: (0, 0),
                            pipeline_mode=pl.Buffered(1))

        def _copy(x_ref, o_ref):
            o_ref[...] = x_ref[...]

        fn = pl.pallas_call(
            _copy,
            out_shape=jax.ShapeDtypeStruct((8, 128), jnp.float32),
            grid=(1,),
            in_specs=[spec],
            out_specs=pl.BlockSpec((8, 128), lambda i: (0, 0)),
        )
        jax.jit(fn).lower(jax.ShapeDtypeStruct((8, 128), jnp.float32)).compile()
        return True
    except Exception:
        return False


_HAS_BUFFERED = _detect_buffered_support()


def _vmem_capacity_bytes():
    """Physical VMEM per TensorCore (64 MiB on v7x, 128 MiB on v5e/v6e)."""
    try:
        info = pltpu.get_tpu_info()
        cap = int(getattr(info, "vmem_capacity_bytes", 0) or 0)
        if cap > 0:
            return cap
    except Exception:
        pass
    return 64 << 20  # conservative (v7x-sized) fallback


# ---------------------------------------------------------------------------
# Kernel
# ---------------------------------------------------------------------------

def _ff_kernel(x_ref, w1_ref, b1_ref, w2_ref, b2_ref, g_ref, beta_ref, o_ref,
               *scratch, pre_lnorm: bool, eps: float, inv_d: float, num_k: int):
    def layer_norm(y):
        # One-pass mean / E[y^2] so zero-padded model columns contribute
        # nothing; inv_d uses the true (unpadded) d_model.
        mu = jnp.sum(y, axis=-1, keepdims=True) * inv_d
        ms = jnp.sum(y * y, axis=-1, keepdims=True) * inv_d
        inv = jax.lax.rsqrt(jnp.maximum(ms - mu * mu, 0.0) + eps)
        return ((y - mu) * inv * g_ref[...].astype(jnp.float32)
                + beta_ref[...].astype(jnp.float32))

    if num_k == 1:
        # Resident-weight path: single fused pass, no scratch round-trips.
        x = x_ref[...].astype(jnp.float32)
        core_in = layer_norm(x) if pre_lnorm else x
        h = jnp.dot(core_in.astype(w1_ref.dtype), w1_ref[...],
                    preferred_element_type=jnp.float32)
        h = jnp.maximum(h + b1_ref[...].astype(jnp.float32), 0.0)
        core = jnp.dot(h.astype(w2_ref.dtype), w2_ref[...],
                       preferred_element_type=jnp.float32)
        core = core + b2_ref[...].astype(jnp.float32)
        out = (core + x) if pre_lnorm else layer_norm(x + core)
        o_ref[...] = out.astype(o_ref.dtype)
        return

    # Chunked-K path.
    acc_ref, cin_ref = scratch
    k = pl.program_id(1)

    @pl.when(k == 0)
    def _init():
        # Hoisted once per row tile: LN (pre-LN) / weight-dtype cast of the
        # matmul input. Every k-step just re-loads this scratch.
        acc_ref[...] = jnp.zeros_like(acc_ref)
        x = x_ref[...].astype(jnp.float32)
        cin_ref[...] = (layer_norm(x) if pre_lnorm else x).astype(cin_ref.dtype)

    h = jnp.dot(cin_ref[...], w1_ref[...], preferred_element_type=jnp.float32)
    h = jnp.maximum(h + b1_ref[...].astype(jnp.float32), 0.0)
    acc_ref[...] += jnp.dot(h.astype(w2_ref.dtype), w2_ref[...],
                            preferred_element_type=jnp.float32)

    @pl.when(k == num_k - 1)
    def _finalize():
        x = x_ref[...].astype(jnp.float32)
        core = acc_ref[...] + b2_ref[...].astype(jnp.float32)
        out = (core + x) if pre_lnorm else layer_norm(x + core)
        o_ref[...] = out.astype(o_ref.dtype)


# ---------------------------------------------------------------------------
# Tile planning
# ---------------------------------------------------------------------------

def _choose_tile_n(n_rows, requested):
    n8 = _round_up(n_rows, 8)
    tn = max(8, min(int(requested), n8))
    # Keep >= 2 row tiles whenever there is enough work so the "parallel"
    # axis can shard across both TensorCores on v7x.
    if tn >= n8 and n8 >= 16:
        tn = _round_up((n8 + 1) // 2, 8)
    # MXU / lane friendliness: 128-align the M dim when it is big enough.
    if tn >= 128:
        tn = (tn // 128) * 128
    else:
        tn = _round_up(tn, 8)
    return max(8, tn)


def _align_tile_k(requested, d_inner_p):
    # Largest multiple of 128 that divides the (128-padded) d_inner and is
    # <= requested.
    m = d_inner_p // 128
    c = max(1, min(int(requested) // 128, m))
    while m % c:
        c -= 1
    return c * 128


def _footprint(tn, tk, d_model_p, d_inner_p, bx, bo, bw):
    num_k = d_inner_p // tk
    small_bufs = 1 if _HAS_BUFFERED else 2
    w_bufs = small_bufs if num_k == 1 else 2       # chunks stream -> 2 buffers
    fp = (
        w_bufs * 2 * d_model_p * tk * bw           # W1 / W2 (chunks)
        + w_bufs * tk * 4                          # b1 (chunk)
        + small_bufs * 3 * d_model_p * 4           # b2, gamma, beta
        + 2 * tn * d_model_p * bx                  # x row tiles (double-buffered)
        + 2 * tn * d_model_p * bo                  # output row tiles
        + tn * tk * 4                              # live hidden chunk (f32)
        + 2 * tn * d_model_p * 4                   # live f32 temporaries
        + (4 << 20)                                # compiler headroom
    )
    if num_k > 1:
        fp += tn * d_model_p * 4 + tn * d_model_p * bw   # acc + core_in scratch
    return int(fp)


def _plan_tiles(n_rows, d_model_p, d_inner_p, bx, bo, bw, budget,
                req_tile_n, req_tile_k):
    def fits(tn, tk):
        return _footprint(tn, tk, d_model_p, d_inner_p, bx, bo, bw) <= budget

    if req_tile_n is not None or req_tile_k is not None:
        tk = d_inner_p if req_tile_k is None else _align_tile_k(req_tile_k, d_inner_p)
        tn = _choose_tile_n(n_rows, 256 if req_tile_n is None else req_tile_n)
        return tn, tk

    # 1) Fully VMEM-resident weights when they fit: fetched once for the whole
    #    grid -> MXU-bound.
    for tn_req in (512, 256, 128):
        tn = _choose_tile_n(n_rows, tn_req)
        if fits(tn, d_inner_p):
            return tn, d_inner_p

    # 2) Stream d_inner chunks; big row tiles amortize per-row weight
    #    re-streaming (intensity ~ tile_n flops/byte).
    tk = _align_tile_k(512, d_inner_p)
    for tn_req in (1024, 768, 512, 256, 128):
        tn = _choose_tile_n(n_rows, tn_req)
        if fits(tn, tk):
            return tn, tk

    # 3) Last resort: smallest aligned tiles.
    return _choose_tile_n(n_rows, 128), 128


# ---------------------------------------------------------------------------
# Wrapper
# ---------------------------------------------------------------------------

def rel_positionwise_ff(inp, params, *, pre_lnorm=False, eps=1e-5,
                        tile_n=None, tile_k=None, weight_dtype=jnp.bfloat16):
    """inp: (seq, batch, d_model). Returns the same shape/dtype (eval forward)."""
    seq, batch, d_model = inp.shape
    d_inner = params["w1"].shape[1]
    N = seq * batch

    d_model_p = _round_up(d_model, 128)
    d_inner_p = _round_up(d_inner, 128)
    pad_m = d_model_p - d_model
    pad_i = d_inner_p - d_inner

    bx = jnp.dtype(inp.dtype).itemsize
    bo = bx
    bw = jnp.dtype(weight_dtype).itemsize

    cap = _vmem_capacity_bytes()
    budget = int(cap * 0.9)                      # truthful, generation-aware cap

    tile_n, tile_k = _plan_tiles(N, d_model_p, d_inner_p, bx, bo, bw, budget,
                                 tile_n, tile_k)
    num_rows = -(-N // tile_n)
    num_k = d_inner_p // tile_k
    grid = (num_rows, num_k)

    # Pad + cast operands. Zero padding is exact (see module docstring).
    x2d = inp.reshape(N, d_model)
    if pad_m:
        x2d = jnp.pad(x2d, ((0, 0), (0, pad_m)))
    w1 = jnp.pad(params["w1"].astype(weight_dtype), ((0, pad_m), (0, pad_i)))
    w2 = jnp.pad(params["w2"].astype(weight_dtype), ((0, pad_i), (0, pad_m)))
    b1 = jnp.pad(params["b1"].astype(jnp.float32), (0, pad_i)).reshape(1, d_inner_p)
    b2 = jnp.pad(params["b2"].astype(jnp.float32), (0, pad_m)).reshape(1, d_model_p)
    gamma = jnp.pad(params["gamma"].astype(jnp.float32), (0, pad_m)).reshape(1, d_model_p)
    beta = jnp.pad(params["beta"].astype(jnp.float32), (0, pad_m)).reshape(1, d_model_p)

    kernel = functools.partial(_ff_kernel, pre_lnorm=bool(pre_lnorm),
                               eps=float(eps), inv_d=1.0 / float(d_model),
                               num_k=num_k)

    # Grid-invariant operands are single-buffered when pl.Buffered is usable;
    # streamed weight chunks keep default double buffering for DMA overlap.
    weight_mode = pl.Buffered(1) if (_HAS_BUFFERED and num_k == 1) else None
    const_mode = pl.Buffered(1) if _HAS_BUFFERED else None

    def _spec(shape, index_map, mode):
        if mode is None:
            return pl.BlockSpec(shape, index_map)
        return pl.BlockSpec(shape, index_map, pipeline_mode=mode)

    in_specs = [
        _spec((tile_n, d_model_p), lambda i, k: (i, 0), None),          # x rows
        _spec((d_model_p, tile_k), lambda i, k: (0, k), weight_mode),   # W1
        _spec((1, tile_k),         lambda i, k: (0, k), weight_mode),   # b1
        _spec((tile_k, d_model_p), lambda i, k: (k, 0), weight_mode),   # W2
        _spec((1, d_model_p),      lambda i, k: (0, 0), const_mode),    # b2
        _spec((1, d_model_p),      lambda i, k: (0, 0), const_mode),    # gamma
        _spec((1, d_model_p),      lambda i, k: (0, 0), const_mode),    # beta
    ]

    scratch_shapes = []
    if num_k > 1:
        scratch_shapes = [
            pltpu.VMEM((tile_n, d_model_p), jnp.float32),   # accumulator
            pltpu.VMEM((tile_n, d_model_p), w1.dtype),      # hoisted core_in
        ]

    fp = _footprint(tile_n, tile_k, d_model_p, d_inner_p, bx, bo, bw)
    vmem_limit = int(min(budget, max(fp, 16 << 20)))        # clamped to physical

    weight_stream = 2 * d_model_p * d_inner_p * bw + d_inner_p * 4
    cost = pl.CostEstimate(
        flops=4 * N * d_model_p * d_inner_p + 12 * N * d_model_p,
        transcendentals=N,                                   # one rsqrt per row
        bytes_accessed=int(
            N * d_model_p * (bx + bo)
            + weight_stream * (num_rows if num_k > 1 else 1)  # re-read per row tile
            + 3 * d_model_p * 4),
    )

    out2d = pl.pallas_call(
        kernel,
        out_shape=jax.ShapeDtypeStruct((N, d_model_p), inp.dtype),
        grid=grid,
        in_specs=in_specs,
        out_specs=pl.BlockSpec((tile_n, d_model_p), lambda i, k: (i, 0)),
        scratch_shapes=scratch_shapes,
        compiler_params=pltpu.CompilerParams(
            dimension_semantics=("parallel", "arbitrary"),
            vmem_limit_bytes=vmem_limit),
        cost_estimate=cost,
    )(x2d, w1, b1, w2, b2, gamma, beta)

    if pad_m:
        out2d = out2d[:, :d_model]
    return out2d.reshape(seq, batch, d_model)


# ---------------------------------------------------------------------------
# Parameters / reference / test
# ---------------------------------------------------------------------------

def init_params(key, d_model, d_inner):
    """Deterministic synthetic parameters matching nn.Linear / nn.LayerNorm shapes."""
    k1, k2, k3, k4 = jax.random.split(key, 4)
    bound1 = 1.0 / (d_model ** 0.5)
    bound2 = 1.0 / (d_inner ** 0.5)
    return {
        # Stored already transposed relative to torch (in_features, out_features)
        # so the kernel computes x @ W directly.
        "w1": jax.random.uniform(k1, (d_model, d_inner), jnp.float32, -bound1, bound1),
        "b1": jax.random.uniform(k2, (d_inner,), jnp.float32, -bound1, bound1),
        "w2": jax.random.uniform(k3, (d_inner, d_model), jnp.float32, -bound2, bound2),
        "b2": jax.random.uniform(k4, (d_model,), jnp.float32, -bound2, bound2),
        "gamma": jnp.ones((d_model,), jnp.float32),
        "beta": jnp.zeros((d_model,), jnp.float32),
    }


def _reference(inp, params, *, pre_lnorm=False, eps=1e-5):
    """Pure-JAX f32 reference mirroring the PyTorch forward (eval mode)."""
    def ln(y):
        mu = jnp.mean(y, axis=-1, keepdims=True)
        var = jnp.mean(jnp.square(y - mu), axis=-1, keepdims=True)
        return (y - mu) * jax.lax.rsqrt(var + eps) * params["gamma"] + params["beta"]

    def core(y):
        h = jnp.maximum(y @ params["w1"] + params["b1"], 0.0)
        return h @ params["w2"] + params["b2"]

    if pre_lnorm:
        return core(ln(inp)) + inp
    return ln(inp + core(inp))


if __name__ == "__main__":
    key = jax.random.PRNGKey(0)
    k_param, k_param2, k_inp = jax.random.split(key, 3)

    # Small shapes consistent with the module: seq=8, batch=2, d_model=32, d_inner=64.
    seq, batch, d_model, d_inner = 8, 2, 32, 64
    params = init_params(k_param, d_model, d_inner)
    inp = jax.random.normal(k_inp, (seq, batch, d_model), jnp.float32)

    # Exact-math path (f32 weights), resident-weight (num_k == 1), both LN variants.
    for pre in (False, True):
        fn = jax.jit(functools.partial(rel_positionwise_ff, pre_lnorm=pre,
                                       weight_dtype=jnp.float32))
        out = jax.block_until_ready(fn(inp, params))
        ref = _reference(inp, params, pre_lnorm=pre)
        assert out.shape == inp.shape and out.dtype == inp.dtype
        assert jnp.allclose(out, ref, atol=1e-4, rtol=1e-4), f"f32 mismatch pre={pre}"

    # Default fast path: bf16 weights on the MXU with f32 accumulation.
    for pre in (False, True):
        fn = jax.jit(functools.partial(rel_positionwise_ff, pre_lnorm=pre))
        out = jax.block_until_ready(fn(inp, params))
        ref = _reference(inp, params, pre_lnorm=pre)
        assert jnp.allclose(out, ref, atol=3e-2, rtol=3e-2), f"bf16 mismatch pre={pre}"

    # Chunked-d_inner reduction path (num_k > 1), post-LN and pre-LN (hoisted LN).
    d_inner2 = 256
    params2 = init_params(k_param2, d_model, d_inner2)
    for pre in (False, True):
        fn = jax.jit(functools.partial(rel_positionwise_ff, pre_lnorm=pre,
                                       tile_k=128, weight_dtype=jnp.float32))
        out = jax.block_until_ready(fn(inp, params2))
        ref = _reference(inp, params2, pre_lnorm=pre)
        assert jnp.allclose(out, ref, atol=1e-4, rtol=1e-4), f"chunked-K mismatch pre={pre}"

    print("KERNEL_OK")
</pallas_src>

<mosaic_0001>
module attributes {stable_mosaic.version = 11 : i64} {
  func.func @_ff_kernel(%arg0: i32, %arg1: i32, %arg2: memref<8x128xf32, #tpu.memory_space<vmem>>, %arg3: memref<128x128xf32, #tpu.memory_space<vmem>>, %arg4: memref<1x128xf32, #tpu.memory_space<vmem>>, %arg5: memref<128x128xf32, #tpu.memory_space<vmem>>, %arg6: memref<1x128xf32, #tpu.memory_space<vmem>>, %arg7: memref<1x128xf32, #tpu.memory_space<vmem>>, %arg8: memref<1x128xf32, #tpu.memory_space<vmem>>, %arg9: memref<8x128xf32, #tpu.memory_space<vmem>>) attributes {dimension_semantics = [#tpu.dimension_semantics<parallel>, #tpu.dimension_semantics<arbitrary>], iteration_bounds = array<i64: 2, 1>, scalar_prefetch = 0 : i64, scratch_operands = 0 : i64, tpu.core_type = #tpu.core_type<tc>, window_params = [{transform_indices = @transform_0, window_bounds = array<i64: 8, 128>}, {transform_indices = @transform_1, window_bounds = array<i64: 128, 128>}, {transform_indices = @transform_2, window_bounds = array<i64: 1, 128>}, {transform_indices = @transform_3, window_bounds = array<i64: 128, 128>}, {pipeline_mode = #tpu.pipeline_mode<synchronous>, transform_indices = @transform_4, window_bounds = array<i64: 1, 128>}, {pipeline_mode = #tpu.pipeline_mode<synchronous>, transform_indices = @transform_5, window_bounds = array<i64: 1, 128>}, {pipeline_mode = #tpu.pipeline_mode<synchronous>, transform_indices = @transform_6, window_bounds = array<i64: 1, 128>}, {transform_indices = @transform_7, window_bounds = array<i64: 8, 128>}]} {
    %c0 = arith.constant 0 : index
    %c0_0 = arith.constant 0 : index
    %0 = vector.load %arg2[%c0, %c0_0] : memref<8x128xf32, #tpu.memory_space<vmem>>, vector<8x128xf32>
    %c0_1 = arith.constant 0 : index
    %c0_2 = arith.constant 0 : index
    %1 = vector.load %arg3[%c0_1, %c0_2] : memref<128x128xf32, #tpu.memory_space<vmem>>, vector<128x128xf32>
    %cst = arith.constant dense<0.000000e+00> : vector<8x128xf32>
    %2 = tpu.matmul %0, %1, %cst {dimension_numbers = #tpu.dot_dimension_numbers<[1], [0], [0], [1], [0, 0, 1, 1], [], []>} : vector<8x128xf32>, vector<128x128xf32>, vector<8x128xf32> -> vector<8x128xf32>
    %c0_3 = arith.constant 0 : index
    %c0_4 = arith.constant 0 : index
    %3 = vector.load %arg4[%c0_3, %c0_4] : memref<1x128xf32, #tpu.memory_space<vmem>>, vector<1x128xf32>
    %4 = vector.broadcast %3 : vector<1x128xf32> to vector<8x128xf32>
    %5 = arith.addf %2, %4 : vector<8x128xf32>
    %cst_5 = arith.constant 0.000000e+00 : f32
    %6 = vector.broadcast %cst_5 : f32 to vector<8x128xf32>
    %7 = arith.maximumf %5, %6 : vector<8x128xf32>
    %c0_6 = arith.constant 0 : index
    %c0_7 = arith.constant 0 : index
    %8 = vector.load %arg5[%c0_6, %c0_7] : memref<128x128xf32, #tpu.memory_space<vmem>>, vector<128x128xf32>
    %cst_8 = arith.constant dense<0.000000e+00> : vector<8x128xf32>
    %9 = tpu.matmul %7, %8, %cst_8 {dimension_numbers = #tpu.dot_dimension_numbers<[1], [0], [0], [1], [0, 0, 1, 1], [], []>} : vector<8x128xf32>, vector<128x128xf32>, vector<8x128xf32> -> vector<8x128xf32>
    %c0_9 = arith.constant 0 : index
    %c0_10 = arith.constant 0 : index
    %10 = vector.load %arg6[%c0_9, %c0_10] : memref<1x128xf32, #tpu.memory_space<vmem>>, vector<1x128xf32>
    %11 = vector.broadcast %10 : vector<1x128xf32> to vector<8x128xf32>
    %12 = arith.addf %9, %11 : vector<8x128xf32>
    %13 = arith.addf %0, %12 : vector<8x128xf32>
    %cst_11 = arith.constant dense<0.000000e+00> : vector<8xf32>
    %14 = vector.multi_reduction <add>, %13, %cst_11 [1] : vector<8x128xf32> to vector<8xf32>
    %15 = vector.shape_cast %14 : vector<8xf32> to vector<8x1xf32>
    %cst_12 = arith.constant 3.125000e-02 : f32
    %16 = vector.broadcast %cst_12 : f32 to vector<8x1xf32>
    %17 = arith.mulf %15, %16 : vector<8x1xf32>
    %18 = arith.mulf %13, %13 : vector<8x128xf32>
    %cst_13 = arith.constant dense<0.000000e+00> : vector<8xf32>
    %19 = vector.multi_reduction <add>, %18, %cst_13 [1] : vector<8x128xf32> to vector<8xf32>
    %20 = vector.shape_cast %19 : vector<8xf32> to vector<8x1xf32>
    %cst_14 = arith.constant 3.125000e-02 : f32
    %21 = vector.broadcast %cst_14 : f32 to vector<8x1xf32>
    %22 = arith.mulf %20, %21 : vector<8x1xf32>
    %23 = arith.mulf %17, %17 : vector<8x1xf32>
    %24 = arith.subf %22, %23 : vector<8x1xf32>
    %cst_15 = arith.constant 0.000000e+00 : f32
    %25 = vector.broadcast %cst_15 : f32 to vector<8x1xf32>
    %26 = arith.maximumf %24, %25 : vector<8x1xf32>
    %cst_16 = arith.constant 9.99999974E-6 : f32
    %27 = vector.broadcast %cst_16 : f32 to vector<8x1xf32>
    %28 = arith.addf %26, %27 : vector<8x1xf32>
    %29 = math.rsqrt %28 : vector<8x1xf32>
    %30 = vector.broadcast %17 : vector<8x1xf32> to vector<8x128xf32>
    %31 = arith.subf %13, %30 : vector<8x128xf32>
    %32 = vector.broadcast %29 : vector<8x1xf32> to vector<8x128xf32>
    %33 = arith.mulf %31, %32 : vector<8x128xf32>
    %c0_17 = arith.constant 0 : index
    %c0_18 = arith.constant 0 : index
    %34 = vector.load %arg7[%c0_17, %c0_18] : memref<1x128xf32, #tpu.memory_space<vmem>>, vector<1x128xf32>
    %35 = vector.broadcast %34 : vector<1x128xf32> to vector<8x128xf32>
    %36 = arith.mulf %33, %35 : vector<8x128xf32>
    %c0_19 = arith.constant 0 : index
    %c0_20 = arith.constant 0 : index
    %37 = vector.load %arg8[%c0_19, %c0_20] : memref<1x128xf32, #tpu.memory_space<vmem>>, vector<1x128xf32>
    %38 = vector.broadcast %37 : vector<1x128xf32> to vector<8x128xf32>
    %39 = arith.addf %36, %38 : vector<8x128xf32>
    %c0_21 = arith.constant 0 : index
    %c0_22 = arith.constant 0 : index
    %40 = vector.load %arg9[%c0_21, %c0_22] : memref<8x128xf32, #tpu.memory_space<vmem>>, vector<8x128xf32>
    tpu.vector_store %arg9[%c0_21, %c0_22], %39 {strides = array<i32>} : memref<8x128xf32, #tpu.memory_space<vmem>>, vector<8x128xf32>,
    return
  }
  func.func @transform_0(%arg0: i32, %arg1: i32) -> (i32, i32) {
    %c0_i32 = arith.constant 0 : i32
    %c0_i32_0 = arith.constant 0 : i32
    return %arg0, %c0_i32 : i32, i32
  }
  func.func @transform_1(%arg0: i32, %arg1: i32) -> (i32, i32) {
    %c0_i32 = arith.constant 0 : i32
    %c0_i32_0 = arith.constant 0 : i32
    return %c0_i32, %arg1 : i32, i32
  }
  func.func @transform_2(%arg0: i32, %arg1: i32) -> (i32, i32) {
    %c0_i32 = arith.constant 0 : i32
    %c0_i32_0 = arith.constant 0 : i32
    return %c0_i32, %arg1 : i32, i32
  }
  func.func @transform_3(%arg0: i32, %arg1: i32) -> (i32, i32) {
    %c0_i32 = arith.constant 0 : i32
    %c0_i32_0 = arith.constant 0 : i32
    return %arg1, %c0_i32 : i32, i32
  }
  func.func @transform_4(%arg0: i32, %arg1: i32) -> (i32, i32) {
    %c0_i32 = arith.constant 0 : i32
    %c0_i32_0 = arith.constant 0 : i32
    %c0_i32_1 = arith.constant 0 : i32
    return %c0_i32, %c0_i32_0 : i32, i32
  }
  func.func @transform_5(%arg0: i32, %arg1: i32) -> (i32, i32) {
    %c0_i32 = arith.constant 0 : i32
    %c0_i32_0 = arith.constant 0 : i32
    %c0_i32_1 = arith.constant 0 : i32
    return %c0_i32, %c0_i32_0 : i32, i32
  }
  func.func @transform_6(%arg0: i32, %arg1: i32) -> (i32, i32) {
    %c0_i32 = arith.constant 0 : i32
    %c0_i32_0 = arith.constant 0 : i32
    %c0_i32_1 = arith.constant 0 : i32
    return %c0_i32, %c0_i32_0 : i32, i32
  }
  func.func @transform_7(%arg0: i32, %arg1: i32) -> (i32, i32) {
    %c0_i32 = arith.constant 0 : i32
    %c0_i32_0 = arith.constant 0 : i32
    return %arg0, %c0_i32 : i32, i32
  }
}

</mosaic_0001>

<llo_original>
// kernel: rel_positionwise_ff.1
$region0: #{rel_positionwise_ff.1}
  #allocation0 [shape = 'u32[]', space=smem, size = 0x4, offset = 0x4, fixed_abs, tag = 'smem constant byte address 0x4 - core index']
  #allocation1 [shape = 'u32[144,128]{1,0:T(1,128)}', space=vmem, size = 0x12000, scoped, tag = 'internal scratch']
  %s0 = inlined_call_operand.vmem [shape: f32[16,128], index: 0, kind: input, shape index: {}]
  %s1 = inlined_call_operand.vmem [shape: f32[128,128], index: 1, kind: input, shape index: {}]
  %s2 = inlined_call_operand.vmem [shape: f32[1,128], index: 2, kind: input, shape index: {}]
  %s3 = inlined_call_operand.vmem [shape: f32[128,128], index: 3, kind: input, shape index: {}]
  %s4 = inlined_call_operand.vmem [shape: f32[1,128], index: 4, kind: input, shape index: {}]
  %s5 = inlined_call_operand.vmem [shape: f32[1,128], index: 5, kind: input, shape index: {}]
  %s6 = inlined_call_operand.vmem [shape: f32[1,128], index: 6, kind: input, shape index: {}]
  %s7 = inlined_call_operand.hbm [shape: f32[16,128], index: 7, kind: output, shape index: {}]
  %s8 = sld [smem:[#allocation0]]
  $region61: #{rel_positionwise_ff.1} parent=0
    _
  %s10 = ssub.s32 1, %s8
  %s11 = scalar_select 0, %s10, %s8
  $region1: #{rel_positionwise_ff.1} parent=0
    #allocation2 [shape = 'u8[8192]{0}', space=vmem, size = 0x2000, scoped, tag = 'output window, operand 0']
    #allocation3 [shape = 's32[2]{0}', space=sflag, size = 0x8, scoped, tag = 'scoped memory for rel_positionwise_ff.1']
    %12 = vsyncpa [#allocation3], 0
    %s13 = scalar_lea.sflag [#allocation3], 1
    %14 = vsyncpa %s13, 0
    loop: start=0, step=1, limit=4
    $region2: #{rel_positionwise_ff.1} parent=1 // loop_pre_header
      _
    $region3: #{rel_positionwise_ff.1} parent=1 // loop_header
      %s16 = sphi 0, %s20
      %p17 = scmp.ge.s32.totalorder %s16, 4
      %s23 = sphi 0, %s35
      %s24 = sphi 0, %s31
      %s25 = sphi 0, %s23
      %s26 = sphi 0, %s24
      %s27 = sphi 0, %s25
      %s28 = sphi 0, %s26
      %s38 = sphi 0, %s40
      %s41 = sphi 0, %s38
      %s42 = sphi 0, %s41
      %s58 = sphi 0, %s42
      %s64 = sphi 0, %s66
      %s67 = sphi 0, %s64
      %s68 = sphi 0, %s67
      %s84 = sphi 0, %s68
      %s90 = sphi 0, %s92
      %s93 = sphi 0, %s90
      %s94 = sphi 0, %s93
      %s110 = sphi 0, %s94
      %s116 = sphi 0, %s118
      %s119 = sphi 0, %s116
      %s120 = sphi 0, %s119
      %s136 = sphi 0, %s120
      %s140 = sphi 0, %s140
      %s142 = sphi 0, %s140
      %s143 = sphi 0, %s142
      %s157 = sphi 0, %s143
      %s161 = sphi 0, %s161
      %s163 = sphi 0, %s161
      %s164 = sphi 0, %s163
      %s178 = sphi 0, %s164
      %s182 = sphi 0, %s182
      %s184 = sphi 0, %s182
      %s185 = sphi 0, %s184
      %s199 = sphi 0, %s185
      %s205 = sphi 0, %s207
      %s208 = sphi 0, %s205
      %s209 = sphi 0, %s208
      %s225 = sphi 0, %s209
    $region4: #{rel_positionwise_ff.1} parent=1 // loop_header_branch
      %19 = sbr.rel (%p17) target = $region8
    $region5: #{rel_positionwise_ff.1} parent=1 // loop_body
      %s21 = ssub.s32 %s16, 1
      %s22 = ssub.s32 %s16, 2
      %s29 = sadd.s32 1, %s24
      %p30 = scmp.ge.s32.totalorder %s29, 1
      %s31 = scalar_select %p30, 0, %s29
      %s32 = sadd.s32 1, %s23
      %s33 = scalar_select %p30, %s32, %s23
      %p34 = scmp.ge.s32.totalorder %s33, 2
      %s35 = scalar_select %p34, 0, %s33
      %s36 = ssub.s32 %s23, %s35
      %p37 = scmp.eq.s32.totalorder %s36, 0
      %s39 = sadd.s32 %s38, 1
      %s40 = scalar_select %p37, %s38, %s39
      %p43 = pneg %p37
      %p44 = scmp.eq.s32.totalorder %s16, 1
      %p45 = por %p43, %p44
      %p46 = scmp.ne.s32.totalorder %s38, %s41
      %p47 = scmp.eq.s32.totalorder %s16, 0
      %p48 = por %p46, %p47
      %p49 = scmp.ne.s32.totalorder %s38, %s41
      %p50 = scmp.eq.s32.totalorder %s21, 1
      %p51 = por %p49, %p50
      %p52 = scmp.ne.s32.totalorder %s41, %s42
      %p53 = scmp.eq.s32.totalorder %s21, 0
      %p54 = por %p52, %p53
      %p55 = scmp.ne.s32.totalorder %s41, %s42
      %p56 = scmp.eq.s32.totalorder %s22, 1
      %p57 = por %p55, %p56
      %p59 = scmp.ne.s32.totalorder %s42, %s58
      %p60 = scmp.eq.s32.totalorder %s22, 0
      %p61 = por %p59, %p60
      %s62 = ssub.s32 %s24, %s31
      %p63 = scmp.eq.s32.totalorder %s62, 0
      %s65 = sadd.s32 %s64, 1
      %s66 = scalar_select %p63, %s64, %s65
      %p69 = pneg %p63
      %p70 = scmp.eq.s32.totalorder %s16, 1
      %p71 = por %p69, %p70
      %p72 = scmp.ne.s32.totalorder %s64, %s67
      %p73 = scmp.eq.s32.totalorder %s16, 0
      %p74 = por %p72, %p73
      %p75 = scmp.ne.s32.totalorder %s64, %s67
      %p76 = scmp.eq.s32.totalorder %s21, 1
      %p77 = por %p75, %p76
      %p78 = scmp.ne.s32.totalorder %s67, %s68
      %p79 = scmp.eq.s32.totalorder %s21, 0
      %p80 = por %p78, %p79
      %p81 = scmp.ne.s32.totalorder %s67, %s68
      %p82 = scmp.eq.s32.totalorder %s22, 1
      %p83 = por %p81, %p82
      %p85 = scmp.ne.s32.totalorder %s68, %s84
      %p86 = scmp.eq.s32.totalorder %s22, 0
      %p87 = por %p85, %p86
      %s88 = ssub.s32 %s24, %s31
      %p89 = scmp.eq.s32.totalorder %s88, 0
      %s91 = sadd.s32 %s90, 1
      %s92 = scalar_select %p89, %s90, %s91
      %p95 = pneg %p89
      %p96 = scmp.eq.s32.totalorder %s16, 1
      %p97 = por %p95, %p96
      %p98 = scmp.ne.s32.totalorder %s90, %s93
      %p99 = scmp.eq.s32.totalorder %s16, 0
      %p100 = por %p98, %p99
      %p101 = scmp.ne.s32.totalorder %s90, %s93
      %p102 = scmp.eq.s32.totalorder %s21, 1
      %p103 = por %p101, %p102
      %p104 = scmp.ne.s32.totalorder %s93, %s94
      %p105 = scmp.eq.s32.totalorder %s21, 0
      %p106 = por %p104, %p105
      %p107 = scmp.ne.s32.totalorder %s93, %s94
      %p108 = scmp.eq.s32.totalorder %s22, 1
      %p109 = por %p107, %p108
      %p111 = scmp.ne.s32.totalorder %s94, %s110
      %p112 = scmp.eq.s32.totalorder %s22, 0
      %p113 = por %p111, %p112
      %s114 = ssub.s32 %s24, %s31
      %p115 = scmp.eq.s32.totalorder %s114, 0
      %s117 = sadd.s32 %s116, 1
      %s118 = scalar_select %p115, %s116, %s117
      %p121 = pneg %p115
      %p122 = scmp.eq.s32.totalorder %s16, 1
      %p123 = por %p121, %p122
      %p124 = scmp.ne.s32.totalorder %s116, %s119
      %p125 = scmp.eq.s32.totalorder %s16, 0
      %p126 = por %p124, %p125
      %p127 = scmp.ne.s32.totalorder %s116, %s119
      %p128 = scmp.eq.s32.totalorder %s21, 1
      %p129 = por %p127, %p128
      %p130 = scmp.ne.s32.totalorder %s119, %s120
      %p131 = scmp.eq.s32.totalorder %s21, 0
      %p132 = por %p130, %p131
      %p133 = scmp.ne.s32.totalorder %s119, %s120
      %p134 = scmp.eq.s32.totalorder %s22, 1
      %p135 = por %p133, %p134
      %p137 = scmp.ne.s32.totalorder %s120, %s136
      %p138 = scmp.eq.s32.totalorder %s22, 0
      %p139 = por %p137, %p138
      %s141 = sadd.s32 %s140, 1
      %p144 = scmp.eq.s32.totalorder %s16, 1
      %p145 = scmp.ne.s32.totalorder %s140, %s142
      %p146 = scmp.eq.s32.totalorder %s16, 0
      %p147 = por %p145, %p146
      %p148 = scmp.ne.s32.totalorder %s140, %s142
      %p149 = scmp.eq.s32.totalorder %s21, 1
      %p150 = por %p148, %p149
      %p151 = scmp.ne.s32.totalorder %s142, %s143
      %p152 = scmp.eq.s32.totalorder %s21, 0
      %p153 = por %p151, %p152
      %p154 = scmp.ne.s32.totalorder %s142, %s143
      %p155 = scmp.eq.s32.totalorder %s22, 1
      %p156 = por %p154, %p155
      %p158 = scmp.ne.s32.totalorder %s143, %s157
      %p159 = scmp.eq.s32.totalorder %s22, 0
      %p160 = por %p158, %p159
      %s162 = sadd.s32 %s161, 1
      %p165 = scmp.eq.s32.totalorder %s16, 1
      %p166 = scmp.ne.s32.totalorder %s161, %s163
      %p167 = scmp.eq.s32.totalorder %s16, 0
      %p168 = por %p166, %p167
      %p169 = scmp.ne.s32.totalorder %s161, %s163
      %p170 = scmp.eq.s32.totalorder %s21, 1
      %p171 = por %p169, %p170
      %p172 = scmp.ne.s32.totalorder %s163, %s164
      %p173 = scmp.eq.s32.totalorder %s21, 0
      %p174 = por %p172, %p173
      %p175 = scmp.ne.s32.totalorder %s163, %s164
      %p176 = scmp.eq.s32.totalorder %s22, 1
      %p177 = por %p175, %p176
      %p179 = scmp.ne.s32.totalorder %s164, %s178
      %p180 = scmp.eq.s32.totalorder %s22, 0
      %p181 = por %p179, %p180
      %s183 = sadd.s32 %s182, 1
      %p186 = scmp.eq.s32.totalorder %s16, 1
      %p187 = scmp.ne.s32.totalorder %s182, %s184
      %p188 = scmp.eq.s32.totalorder %s16, 0
      %p189 = por %p187, %p188
      %p190 = scmp.ne.s32.totalorder %s182, %s184
      %p191 = scmp.eq.s32.totalorder %s21, 1
      %p192 = por %p190, %p191
      %p193 = scmp.ne.s32.totalorder %s184, %s185
      %p194 = scmp.eq.s32.totalorder %s21, 0
      %p195 = por %p193, %p194
      %p196 = scmp.ne.s32.totalorder %s184, %s185
      %p197 = scmp.eq.s32.totalorder %s22, 1
      %p198 = por %p196, %p197
      %p200 = scmp.ne.s32.totalorder %s185, %s199
      %p201 = scmp.eq.s32.totalorder %s22, 0
      %p202 = por %p200, %p201
      %s203 = ssub.s32 %s23, %s35
      %p204 = scmp.eq.s32.totalorder %s203, 0
      %s206 = sadd.s32 %s205, 1
      %s207 = scalar_select %p204, %s205, %s206
      %p210 = pneg %p204
      %p211 = scmp.eq.s32.totalorder %s16, 1
      %p212 = por %p210, %p211
      %p213 = scmp.ne.s32.totalorder %s205, %s208
      %p214 = scmp.eq.s32.totalorder %s16, 0
      %p215 = por %p213, %p214
      %p216 = scmp.ne.s32.totalorder %s205, %s208
      %p217 = scmp.eq.s32.totalorder %s21, 1
      %p218 = por %p216, %p217
      %p219 = scmp.ne.s32.totalorder %s208, %s209
      %p220 = scmp.eq.s32.totalorder %s21, 0
      %p221 = por %p219, %p220
      %p222 = scmp.ne.s32.totalorder %s208, %s209
      %p223 = scmp.eq.s32.totalorder %s22, 1
      %p224 = por %p222, %p223
      %p226 = scmp.ne.s32.totalorder %s209, %s225
      %p227 = scmp.eq.s32.totalorder %s22, 0
      %p228 = por %p226, %p227
      %p229 = scmp.le.s32.totalorder 1, %s16
      %p230 = scmp.lt.s32.totalorder %s16, 3
      %p231 = pnand %p229, %p230
      %p232 = pneg %p231
      // Predicated region
      $region9: #{rel_positionwise_ff.1} parent=5 // pred_check
        _
      $region10: #{rel_positionwise_ff.1} parent=5 // pred_check_branch
        %234 = sbr.rel (%p231) target = $region12
      $region11: #{rel_positionwise_ff.1} parent=5 // pred_region
        %s235 = ssub.s32 %s16, 1
        // Predicated region
        $region13: #{rel_positionwise_ff.1} parent=11 // pred_check
          %p236 = pneg %p80
        $region14: #{rel_positionwise_ff.1} parent=11 // pred_check_branch
          %238 = sbr.rel (%p236) target = $region16
        $region15: #{rel_positionwise_ff.1} parent=11 // pred_region
          %p239 = scmp.lt.s32.totalorder %s26, 0
          %s240 = scalar_select %p239, %s26, 0
          %s241 = smul.addr %s240, 8
          %s242 = scalar_lea.vmem %s1, %s241
        $region16: #{rel_positionwise_ff.1} parent=11 // pred_fallthru
          _
        // Predicated region
        $region17: #{rel_positionwise_ff.1} parent=11 // pred_check
          %p243 = pneg %p106
        $region18: #{rel_positionwise_ff.1} parent=11 // pred_check_branch
          %245 = sbr.rel (%p243) target = $region20
        $region19: #{rel_positionwise_ff.1} parent=11 // pred_region
          %p246 = scmp.lt.s32.totalorder %s26, 0
          %s247 = scalar_select %p246, %s26, 0
          %s248 = scalar_lea.vmem %s2, %s247
        $region20: #{rel_positionwise_ff.1} parent=11 // pred_fallthru
          _
        // Predicated region
        $region21: #{rel_positionwise_ff.1} parent=11 // pred_check
          %p249 = pneg %p132
        $region22: #{rel_positionwise_ff.1} parent=11 // pred_check_branch
          %251 = sbr.rel (%p249) target = $region24
        $region23: #{rel_positionwise_ff.1} parent=11 // pred_region
          %s252 = smul.u32 16, %s26
          %p253 = scmp.lt.s32.totalorder %s252, 15
          %s254 = scalar_select %p253, %s252, 15
          %s255 = smul.addr %s254, 8
          %s256 = scalar_lea.vmem %s3, %s255
          %s257 = smul.u32 16, %s26
        $region24: #{rel_positionwise_ff.1} parent=11 // pred_fallthru
          _
        // Predicated region
        $region25: #{rel_positionwise_ff.1} parent=11 // pred_check
          %p258 = pneg %p153
        $region26: #{rel_positionwise_ff.1} parent=11 // pred_check_branch
          %260 = sbr.rel (%p258) target = $region28
        $region27: #{rel_positionwise_ff.1} parent=11 // pred_region
          _
        $region28: #{rel_positionwise_ff.1} parent=11 // pred_fallthru
          _
        // Predicated region
        $region29: #{rel_positionwise_ff.1} parent=11 // pred_check
          %p261 = pneg %p174
        $region30: #{rel_positionwise_ff.1} parent=11 // pred_check_branch
          %263 = sbr.rel (%p261) target = $region32
        $region31: #{rel_positionwise_ff.1} parent=11 // pred_region
          _
        $region32: #{rel_positionwise_ff.1} parent=11 // pred_fallthru
          _
        // Predicated region
        $region33: #{rel_positionwise_ff.1} parent=11 // pred_check
          %p264 = pneg %p195
        $region34: #{rel_positionwise_ff.1} parent=11 // pred_check_branch
          %266 = sbr.rel (%p264) target = $region36
        $region35: #{rel_positionwise_ff.1} parent=11 // pred_region
          _
        $region36: #{rel_positionwise_ff.1} parent=11 // pred_fallthru
          _
      $region12: #{rel_positionwise_ff.1} parent=5 // pred_fallthru
        _
      %p267 = scmp.lt.s32.totalorder %s16, 2
      // Predicated region
      $region37: #{rel_positionwise_ff.1} parent=5 // pred_check
        %p268 = pneg %p267
      $region38: #{rel_positionwise_ff.1} parent=5 // pred_check_branch
        %270 = sbr.rel (%p268) target = $region40
      $region39: #{rel_positionwise_ff.1} parent=5 // pred_region
        // Predicated region
        $region41: #{rel_positionwise_ff.1} parent=39 // pred_check
          %p271 = pneg %p48
        $region42: #{rel_positionwise_ff.1} parent=39 // pred_check_branch
          %273 = sbr.rel (%p271) target = $region44
        $region43: #{rel_positionwise_ff.1} parent=39 // pred_region
          %p274 = scmp.lt.s32.totalorder %s23, 1
          %s275 = scalar_select %p274, %s23, 1
          %s276 = smul.addr %s275, 8
          %s277 = scalar_lea.vmem %s0, %s276
        $region44: #{rel_positionwise_ff.1} parent=39 // pred_fallthru
          _
      $region40: #{rel_positionwise_ff.1} parent=5 // pred_fallthru
        _
      %p278 = scmp.le.s32.totalorder 1, %s16
      %p279 = scmp.lt.s32.totalorder %s16, 3
      %p280 = pnand %p278, %p279
      %p281 = pneg %p280
      // Predicated region
      $region45: #{rel_positionwise_ff.1} parent=5 // pred_check
        _
      $region46: #{rel_positionwise_ff.1} parent=5 // pred_check_branch
        %283 = sbr.rel (%p280) target = $region48
      $region47: #{rel_positionwise_ff.1} parent=5 // pred_region
        %s284 = ssub.s32 %s16, 1
        %p285 = scmp.lt.s32.totalorder %s25, 1
        %s286 = scalar_select %p285, %s25, 1
        %s287 = smul.addr %s286, 8
        %s288 = scalar_lea.vmem %s0, %s287
        %p289 = pneg %p54
        %p290 = pneg %p51
        %p291 = scmp.lt.s32.totalorder %s26, 0
        %s292 = scalar_select %p291, %s26, 0
        %s293 = smul.addr %s292, 8
        %s294 = scalar_lea.vmem %s1, %s293
        %p295 = pneg %p80
        %p296 = pneg %p77
        %p297 = scmp.lt.s32.totalorder %s26, 0
        %s298 = scalar_select %p297, %s26, 0
        %s299 = scalar_lea.vmem %s2, %s298
        %p300 = pneg %p106
        %p301 = pneg %p103
        %s302 = smul.u32 16, %s26
        %p303 = scmp.lt.s32.totalorder %s302, 15
        %s304 = scalar_select %p303, %s302, 15
        %s305 = smul.addr %s304, 8
        %s306 = scalar_lea.vmem %s3, %s305
        %p307 = pneg %p132
        %p308 = pneg %p129
        %p309 = pneg %p153
        %p310 = pneg %p150
        %p311 = pneg %p174
        %p312 = pneg %p171
        %p313 = pneg %p195
        %p314 = pneg %p192
        %p315 = pneg %p221
        %p316 = pneg %p218
        %s317 = sand.u32 %s208, 1
        %s318 = scalar_lea.sflag [#allocation3], %s317
        %s319 = sand.u32 %s208, 1
        %s320 = smul.addr %s319, 8
        %s321 = scalar_lea.vmem [#allocation2], %s320
        %p322 = scmp.lt.s32.totalorder %s25, 1
        %s323 = scalar_select %p322, %s25, 1
        %s324 = smul.addr %s323, 8
        %s325 = scalar_lea.vmem %s0, %s324
        %p326 = scmp.lt.s32.totalorder %s26, 0
        %s327 = scalar_select %p326, %s26, 0
        %s328 = smul.addr %s327, 8
        %s329 = scalar_lea.vmem %s1, %s328
        %p330 = scmp.lt.s32.totalorder %s26, 0
        %s331 = scalar_select %p330, %s26, 0
        %s332 = scalar_lea.vmem %s2, %s331
        %s333 = smul.u32 16, %s26
        %p334 = scmp.lt.s32.totalorder %s333, 15
        %s335 = scalar_select %p334, %s333, 15
        %s336 = smul.addr %s335, 8
        %s337 = scalar_lea.vmem %s3, %s336
        %s338 = smul.u32 16, %s26
        %v339 = vld [vmem:[%s325] sm:$0xff]
        %v340 = vld [vmem:[%s329] sm:$0xff]
        %v341 = vld [vmem:[%s329 + $0x8] sm:$0xff]
        %v342 = vld [vmem:[%s329 + $0x10] sm:$0xff]
        %v343 = vld [vmem:[%s329 + $0x18] sm:$0xff]
        %v344 = vld [vmem:[%s329 + $0x20] sm:$0xff]
        %v345 = vld [vmem:[%s329 + $0x28] sm:$0xff]
        %v346 = vld [vmem:[%s329 + $0x30] sm:$0xff]
        %v347 = vld [vmem:[%s329 + $0x38] sm:$0xff]
        %v348 = vld [vmem:[%s329 + $0x40] sm:$0xff]
        %v349 = vld [vmem:[%s329 + $0x48] sm:$0xff]
        %v350 = vld [vmem:[%s329 + $0x50] sm:$0xff]
        %v351 = vld [vmem:[%s329 + $0x58] sm:$0xff]
        %v352 = vld [vmem:[%s329 + $0x60] sm:$0xff]
        %v353 = vld [vmem:[%s329 + $0x68] sm:$0xff]
        %v354 = vld [vmem:[%s329 + $0x70] sm:$0xff]
        %v355 = vld [vmem:[%s329 + $0x78] sm:$0xff]
        %v356 = vld [vmem:[%s332] sm:$0x1]
        %v358 = vlaneseq
        %v359 = vshrl.u32 %v358, 7
        %v360 = vsub.s32 0, %v359
        %v361 = vrot.slane %v356, %v360
        %363 = vmatprep.subr.mxu0 0.0
        %364 = vmatpush1.msra.mxu0 %v355
        %365 = vmatprep.subr.mxu0 0.0
        %366 = vmatpush1.msra.mxu0 %v354
        %367 = vmatprep.subr.mxu0 0.0
        %368 = vmatpush1.msra.mxu0 %v353
        %369 = vmatprep.subr.mxu0 0.0
        %370 = vmatpush1.msra.mxu0 %v352
        %371 = vmatprep.subr.mxu0 0.0
        %372 = vmatpush1.msra.mxu0 %v351
        %373 = vmatprep.subr.mxu0 0.0
        %374 = vmatpush1.msra.mxu0 %v350
        %375 = vmatprep.subr.mxu0 0.0
        %376 = vmatpush1.msra.mxu0 %v349
        %377 = vmatprep.subr.mxu0 0.0
        %378 = vmatpush1.msra.mxu0 %v348
        %379 = vmatprep.subr.mxu0 0.0
        %380 = vmatpush1.msra.mxu0 %v347
        %381 = vmatprep.subr.mxu0 0.0
        %382 = vmatpush1.msra.mxu0 %v346
        %383 = vmatprep.subr.mxu0 0.0
        %384 = vmatpush1.msra.mxu0 %v345
        %385 = vmatprep.subr.mxu0 0.0
        %386 = vmatpush1.msra.mxu0 %v344
        %387 = vmatprep.subr.mxu0 0.0
        %388 = vmatpush1.msra.mxu0 %v343
        %389 = vmatprep.subr.mxu0 0.0
        %390 = vmatpush1.msra.mxu0 %v342
        %391 = vmatprep.subr.mxu0 0.0
        %392 = vmatpush1.msra.mxu0 %v341
        %393 = vmatprep.subr.mxu0 0.0
        %394 = vmatpush1.msra.mxu0 %v340
        %395 = vmatprep.subr.mxu0 0.0
        %396 = vmatpush2.msra.mxu0 0.0
        %397 = vmatprep.subr.mxu0 0.0
        %398 = vmatpush2.msra.mxu0 0.0
        %399 = vmatprep.subr.mxu0 0.0
        %400 = vmatpush2.msra.mxu0 0.0
        %401 = vmatprep.subr.mxu0 0.0
        %402 = vmatpush2.msra.mxu0 0.0
        %403 = vmatprep.subr.mxu0 0.0
        %404 = vmatpush2.msra.mxu0 0.0
        %405 = vmatprep.subr.mxu0 0.0
        %406 = vmatpush2.msra.mxu0 0.0
        %407 = vmatprep.subr.mxu0 0.0
        %408 = vmatpush2.msra.mxu0 0.0
        %409 = vmatprep.subr.mxu0 0.0
        %410 = vmatpush2.msra.mxu0 0.0
        %411 = vmatprep.subr.mxu0 0.0
        %412 = vmatpush2.msra.mxu0 0.0
        %413 = vmatprep.subr.mxu0 0.0
        %414 = vmatpush2.msra.mxu0 0.0
        %415 = vmatprep.subr.mxu0 0.0
        %416 = vmatpush2.msra.mxu0 0.0
        %417 = vmatprep.subr.mxu0 0.0
        %418 = vmatpush2.msra.mxu0 0.0
        %419 = vmatprep.subr.mxu0 0.0
        %420 = vmatpush2.msra.mxu0 0.0
        %421 = vmatprep.subr.mxu0 0.0
        %422 = vmatpush2.msra.mxu0 0.0
        %423 = vmatprep.subr.mxu0 0.0
        %424 = vmatpush2.msra.mxu0 0.0
        %425 = vmatprep.subr.mxu0 0.0
        %426 = vmatpush2.msra.mxu0 0.0
        %427 = vmatprep.mubr.f32.mxu0 0.0
        %428 = vmatmul.mubr.f32.gmra.mxu0 %v339
        %v429 = vpop.f32.mrf.mxu0
        %v430 = vadd.f32 %v361, %v429
        %v431 = vpop.f32.mrf.mxu0
        %432 = vdwg.mxu0
        %v433 = vmax.f32 %v430, 0.0
        %v434 = vld [vmem:[%s337] sm:$0xff]
        %v435 = vld [vmem:[%s337 + $0x8] sm:$0xff]
        %v436 = vld [vmem:[%s337 + $0x10] sm:$0xff]
        %v437 = vld [vmem:[%s337 + $0x18] sm:$0xff]
        %v438 = vld [vmem:[%s337 + $0x20] sm:$0xff]
        %v439 = vld [vmem:[%s337 + $0x28] sm:$0xff]
        %v440 = vld [vmem:[%s337 + $0x30] sm:$0xff]
        %v441 = vld [vmem:[%s337 + $0x38] sm:$0xff]
        %v442 = vld [vmem:[%s337 + $0x40] sm:$0xff]
        %v443 = vld [vmem:[%s337 + $0x48] sm:$0xff]
        %v444 = vld [vmem:[%s337 + $0x50] sm:$0xff]
        %v445 = vld [vmem:[%s337 + $0x58] sm:$0xff]
        %v446 = vld [vmem:[%s337 + $0x60] sm:$0xff]
        %v447 = vld [vmem:[%s337 + $0x68] sm:$0xff]
        %v448 = vld [vmem:[%s337 + $0x70] sm:$0xff]
        %v449 = vld [vmem:[%s337 + $0x78] sm:$0xff]
        %v450 = vld [vmem:[%s4] sm:$0x1]
        %v452 = vlaneseq
        %v453 = vshrl.u32 %v452, 7
        %v454 = vsub.s32 0, %v453
        %v455 = vrot.slane %v450, %v454
        %457 = vmatprep.subr.mxu0 0.0
        %458 = vmatpush1.msra.mxu0 %v449
        %459 = vmatprep.subr.mxu0 0.0
        %460 = vmatpush1.msra.mxu0 %v448
        %461 = vmatprep.subr.mxu0 0.0
        %462 = vmatpush1.msra.mxu0 %v447
        %463 = vmatprep.subr.mxu0 0.0
        %464 = vmatpush1.msra.mxu0 %v446
        %465 = vmatprep.subr.mxu0 0.0
        %466 = vmatpush1.msra.mxu0 %v445
        %467 = vmatprep.subr.mxu0 0.0
        %468 = vmatpush1.msra.mxu0 %v444
        %469 = vmatprep.subr.mxu0 0.0
        %470 = vmatpush1.msra.mxu0 %v443
        %471 = vmatprep.subr.mxu0 0.0
        %472 = vmatpush1.msra.mxu0 %v442
        %473 = vmatprep.subr.mxu0 0.0
        %474 = vmatpush1.msra.mxu0 %v441
        %475 = vmatprep.subr.mxu0 0.0
        %476 = vmatpush1.msra.mxu0 %v440
        %477 = vmatprep.subr.mxu0 0.0
        %478 = vmatpush1.msra.mxu0 %v439
        %479 = vmatprep.subr.mxu0 0.0
        %480 = vmatpush1.msra.mxu0 %v438
        %481 = vmatprep.subr.mxu0 0.0
        %482 = vmatpush1.msra.mxu0 %v437
        %483 = vmatprep.subr.mxu0 0.0
        %484 = vmatpush1.msra.mxu0 %v436
        %485 = vmatprep.subr.mxu0 0.0
        %486 = vmatpush1.msra.mxu0 %v435
        %487 = vmatprep.subr.mxu0 0.0
        %488 = vmatpush1.msra.mxu0 %v434
        %489 = vmatprep.subr.mxu0 0.0
        %490 = vmatpush2.msra.mxu0 0.0
        %491 = vmatprep.subr.mxu0 0.0
        %492 = vmatpush2.msra.mxu0 0.0
        %493 = vmatprep.subr.mxu0 0.0
        %494 = vmatpush2.msra.mxu0 0.0
        %495 = vmatprep.subr.mxu0 0.0
        %496 = vmatpush2.msra.mxu0 0.0
        %497 = vmatprep.subr.mxu0 0.0
        %498 = vmatpush2.msra.mxu0 0.0
        %499 = vmatprep.subr.mxu0 0.0
        %500 = vmatpush2.msra.mxu0 0.0
        %501 = vmatprep.subr.mxu0 0.0
        %502 = vmatpush2.msra.mxu0 0.0
        %503 = vmatprep.subr.mxu0 0.0
        %504 = vmatpush2.msra.mxu0 0.0
        %505 = vmatprep.subr.mxu0 0.0
        %506 = vmatpush2.msra.mxu0 0.0
        %507 = vmatprep.subr.mxu0 0.0
        %508 = vmatpush2.msra.mxu0 0.0
        %509 = vmatprep.subr.mxu0 0.0
        %510 = vmatpush2.msra.mxu0 0.0
        %511 = vmatprep.subr.mxu0 0.0
        %512 = vmatpush2.msra.mxu0 0.0
        %513 = vmatprep.subr.mxu0 0.0
        %514 = vmatpush2.msra.mxu0 0.0
        %515 = vmatprep.subr.mxu0 0.0
        %516 = vmatpush2.msra.mxu0 0.0
        %517 = vmatprep.subr.mxu0 0.0
        %518 = vmatpush2.msra.mxu0 0.0
        %519 = vmatprep.subr.mxu0 0.0
        %520 = vmatpush2.msra.mxu0 0.0
        %521 = vmatprep.mubr.f32.mxu0 0.0
        %522 = vmatmul.mubr.f32.gmra.mxu0 %v433
        %v523 = vpop.f32.mrf.mxu0
        %v524 = vadd.f32 %v455, %v523
        %v525 = vpop.f32.mrf.mxu0
        %526 = vdwg.mxu0
        %v527 = vadd.f32 %v339, %v524
        %528 = vadd.xlane.f32.xlu0 %v527
        %v529 = vpop.xlane.xlu0 %528
        %v530 = vmul.f32 %v529, 0.03125
        %v531 = vmul.f32 %v527, %v527
        %532 = vadd.xlane.f32.xlu0 %v531
        %v533 = vpop.xlane.xlu0 %532
        %v534 = vmul.f32 %v533, 0.03125
        %v535 = vmul.f32 %v530, %v530
        %v536 = vsub.f32 %v534, %v535
        %v537 = vmax.f32 %v536, 0.0
        %v538 = vadd.f32 %v537, 1e-05
        %v539 = vrsqrt.pop %v538
        %v540 = vsub.f32 %v527, %v530
        %v541 = vmul.f32 %v540, %v539
        %v542 = vld [vmem:[%s5] sm:$0x1]
        %v544 = vlaneseq
        %v545 = vshrl.u32 %v544, 7
        %v546 = vsub.s32 0, %v545
        %v547 = vrot.slane %v542, %v546
        %v549 = vmul.f32 %v541, %v547
        %v550 = vld [vmem:[%s6] sm:$0x1]
        %v552 = vlaneseq
        %v553 = vshrl.u32 %v552, 7
        %v554 = vsub.s32 0, %v553
        %v555 = vrot.slane %v550, %v554
        %v557 = vadd.f32 %v549, %v555
        %558 = vst [vmem:[%s321] sm:$0xff] %v557
        %s559 = sand.u32 %s208, 1
        %s560 = scalar_lea.sflag [#allocation3], %s559
        %s561 = sand.u32 %s208, 1
        %s562 = smul.addr %s561, 8
        %s563 = scalar_lea.vmem [#allocation2], %s562
        // Predicated region
        $region49: #{rel_positionwise_ff.1} parent=47 // pred_check
          %p564 = pneg %p218
        $region50: #{rel_positionwise_ff.1} parent=47 // pred_check_branch
          %566 = sbr.rel (%p564) target = $region52
        $region51: #{rel_positionwise_ff.1} parent=47 // pred_region
          %s568 = ssub.s32 128, 128
          %569 = vsyncadd %s560, %s568
          %s570 = smul.addr %s25, 128
          %s571 = scalar_lea.hbm %s7, %s570
          %s573 = sshll.u32 %s563, 4
          %s574 = int_to_ptr.vmem [resolvable:$true] %s573
          %576 = dma.vmem_to_hbm [thread:$0]  %s574, 128, %s571, %s560
        $region52: #{rel_positionwise_ff.1} parent=47 // pred_fallthru
          _
      $region48: #{rel_positionwise_ff.1} parent=5 // pred_fallthru
        _
      %p577 = scmp.le.s32.totalorder 2, %s16
      // Predicated region
      $region53: #{rel_positionwise_ff.1} parent=5 // pred_check
        %p578 = pneg %p577
      $region54: #{rel_positionwise_ff.1} parent=5 // pred_check_branch
        %580 = sbr.rel (%p578) target = $region56
      $region55: #{rel_positionwise_ff.1} parent=5 // pred_region
        %s581 = ssub.s32 %s16, 2
        // Predicated region
        $region57: #{rel_positionwise_ff.1} parent=55 // pred_check
          %p582 = pneg %p224
        $region58: #{rel_positionwise_ff.1} parent=55 // pred_check_branch
          %584 = sbr.rel (%p582) target = $region60
        $region59: #{rel_positionwise_ff.1} parent=55 // pred_region
          %s585 = sand.u32 %s209, 1
          %s586 = scalar_lea.sflag [#allocation3], %s585
          %s587 = sand.u32 %s209, 1
          %s588 = smul.addr %s587, 8
          %s589 = scalar_lea.vmem [#allocation2], %s588
          %590 = dma.done %s586, 128
        $region60: #{rel_positionwise_ff.1} parent=55 // pred_fallthru
          _
      $region56: #{rel_positionwise_ff.1} parent=5 // pred_fallthru
        _
    $region6: #{rel_positionwise_ff.1} parent=1 // loop_footer
      %s20 = sadd.s32 1, %s16
    $region7: #{rel_positionwise_ff.1} parent=1 // loop_footer_branch
      %15 = sbr.rel target = $region3
    $region8: #{rel_positionwise_ff.1} parent=1 // loop_exit
      _
    %591 = vsyncpa [#allocation3], 1
    %s592 = scalar_lea.sflag [#allocation3], 1
    %593 = vsyncpa %s592, 1

</llo_original>
